<compile_context>
chip_gen: v7x
topology: tpu7x:2x2x1
jax: 0.10.0
libtpu: 0.0.40
codegen_flags: <defaults>
</compile_context>

<pallas_src>
import functools

import jax
import jax.numpy as jnp
from jax import lax
from jax.experimental import pallas as pl
from jax.experimental.pallas import tpu as pltpu


def _df_kernel(x_ref, w1_ref, b1_ref, w2_ref, b2_ref, w3_ref, b3_ref, o_ref,
               *, H, W, xres):
    """Fused DF forward for one image, channel-major (C, H*W) layout.

    x_ref : (1, C, HW)   f32  input image, spatial flattened into lanes
    w1_ref: (NH, C)      bf16 fc1 1x1 weight   (t channel folded into b1)
    b1_ref: (NH, 1)      f32  b1 + t * w1[C, :]
    w2_ref: (NH, 9*NH)   bf16 fc2 3x3 weight, 9 taps stacked along K
    b2_ref: (NH, HW)     f32  b2 + t * (zero-padded conv of the t channel)
    w3_ref: (C, NH)      bf16 fc3 1x1 weight   (t channel folded into b3)
    b3_ref: (C, 1)       f32  b3 + t * w3[NH, :]
    o_ref : (1, C, HW)   f32  output
    """
    HW = H * W
    x = x_ref[0]                                            # (C, HW) f32

    # ---- fc1 (1x1 conv): single (NH, C) @ (C, HW) matmul, spatial in lanes.
    h1 = jnp.dot(w1_ref[...], x.astype(jnp.bfloat16),
                 preferred_element_type=jnp.float32)
    h1 = jnp.maximum(h1 + b1_ref[...], 0.0)                 # (NH, HW) f32

    # ---- fc2 (3x3 conv, padding=1):
    # Pad the flattened spatial (lane) axis with W+1 zeros on each side; the
    # tap (dy, dx) is then the static lane window at offset (W+1) + dy*W + dx.
    # Row out-of-bounds taps automatically read the zero margins; only the
    # column wrap-arounds (dx = +/-1) need a mask.  All 9 taps are stacked
    # along the contraction dim and contracted in one K = 9*NH MXU matmul.
    h1b = h1.astype(jnp.bfloat16)
    zpad = jnp.zeros((h1b.shape[0], W + 1), jnp.bfloat16)
    g = jnp.concatenate([zpad, h1b, zpad], axis=1)          # (NH, HW + 2W + 2)

    col = lax.broadcasted_iota(jnp.int32, (1, HW), 1) % W   # column index per lane
    taps = []
    for ky in range(3):
        for kx in range(3):
            d = (ky - 1) * W + (kx - 1)
            win = h1b if d == 0 else g[:, W + 1 + d: W + 1 + d + HW]
            if kx == 0:                                     # dx = -1: x-1 >= 0
                win = jnp.where(col >= 1, win, jnp.zeros_like(win))
            elif kx == 2:                                   # dx = +1: x+1 < W
                win = jnp.where(col < W - 1, win, jnp.zeros_like(win))
            taps.append(win)
    stacked = jnp.concatenate(taps, axis=0)                 # (9*NH, HW) bf16

    h2 = jnp.dot(w2_ref[...], stacked, preferred_element_type=jnp.float32)
    h2 = jnp.maximum(h2 + b2_ref[...], 0.0)                 # (NH, HW) f32

    # ---- fc3 (1x1 conv) + residual.
    y = jnp.dot(w3_ref[...], h2.astype(jnp.bfloat16),
                preferred_element_type=jnp.float32)         # (C, HW)
    o_ref[0] = y + b3_ref[...] + xres * x


@functools.partial(jax.jit, static_argnames=("xres",))
def df_forward(t, x0, params, *, xres):
    """x0: (B, 1, C, H, W) f32, t: scalar -> (B, 1, C, H, W).  model=='hbnode'."""
    w1, b1, w2, b2, w3, b3 = params
    B, _, C, H, W = x0.shape
    NH = b1.shape[0]
    HW = H * W
    t = jnp.asarray(t, jnp.float32)

    # Channel-major lane-dense input: (B, C, H*W) is a pure reshape of NCHW.
    x_cm = x0.reshape(B, C, HW)

    # t is constant over the image, so for the 1x1 convs its channel folds
    # exactly into the bias; weights are pre-transposed to (out, in) and cast
    # to bf16 for the MXU.
    w1m = jnp.transpose(w1[:C, :]).astype(jnp.bfloat16)            # (NH, C)
    b1e = (b1 + t * w1[C, :]).astype(jnp.float32).reshape(NH, 1)
    w3m = jnp.transpose(w3[:NH, :]).astype(jnp.bfloat16)           # (C, NH)
    b3e = (b3 + t * w3[NH, :]).astype(jnp.float32).reshape(C, 1)

    # fc2 weight: stack the 9 taps along the contraction dim so the kernel can
    # run a single K = 9*NH matmul; column order = (ky*3 + kx)*NH + cin.
    w2s = jnp.transpose(w2[:, :, :NH, :], (3, 0, 1, 2)).reshape(NH, 9 * NH)
    w2s = w2s.astype(jnp.bfloat16)

    # fc2's t channel interacts with the zero padding, so it cannot fold into
    # a scalar bias; but it depends only on (t, w2, H, W) -> precompute its
    # per-pixel contribution once per call (together with b2) as a bias map.
    k = jnp.arange(3) - 1
    yv = ((jnp.arange(H)[None, :] + k[:, None] >= 0) &
          (jnp.arange(H)[None, :] + k[:, None] < H)).astype(jnp.float32)  # (3, H)
    xv = ((jnp.arange(W)[None, :] + k[:, None] >= 0) &
          (jnp.arange(W)[None, :] + k[:, None] < W)).astype(jnp.float32)  # (3, W)
    tmap = jnp.einsum('abo,ay,bx->oyx', w2[:, :, NH, :], yv, xv)          # (NH, H, W)
    b2e = (b2[:, None] + t * tmap.reshape(NH, HW)).astype(jnp.float32)

    kern = functools.partial(_df_kernel, H=H, W=W, xres=float(xres))
    full = lambda a: pl.BlockSpec(a.shape, lambda b: (0,) * a.ndim)

    out_cm = pl.pallas_call(
        kern,
        out_shape=jax.ShapeDtypeStruct((B, C, HW), jnp.float32),
        grid_spec=pltpu.PrefetchScalarGridSpec(
            num_scalar_prefetch=0,
            grid=(B,),          # one image per step; "parallel" -> 2 v7x cores
            in_specs=[
                pl.BlockSpec((1, C, HW), lambda b: (b, 0, 0)),       # x
                full(w1m), full(b1e), full(w2s), full(b2e),
                full(w3m), full(b3e),
            ],
            out_specs=pl.BlockSpec((1, C, HW), lambda b: (b, 0, 0)),
        ),
        compiler_params=pltpu.CompilerParams(
            dimension_semantics=("parallel",)),
    )(x_cm, w1m, b1e, w2s, b2e, w3m, b3e)

    return out_cm.reshape(B, 1, C, H, W)


def df_reference(t, x0, params, *, xres):
    """Pure-JAX f32 reference (NHWC convs, explicit t channel)."""
    w1, b1, w2, b2, w3, b3 = params
    B, _, C, H, W = x0.shape
    x = jnp.transpose(x0[:, 0], (0, 2, 3, 1))               # (B, H, W, C)
    t_img = jnp.ones((B, H, W, 1), jnp.float32) * t

    h = jnp.concatenate([x, t_img], -1)
    h = jax.nn.relu(jnp.einsum('bhwi,io->bhwo', h, w1) + b1)
    h = jnp.concatenate([h, t_img], -1)
    h = lax.conv_general_dilated(h, w2, (1, 1), 'SAME',
                                 dimension_numbers=('NHWC', 'HWIO', 'NHWC'))
    h = jax.nn.relu(h + b2)
    h = jnp.concatenate([h, t_img], -1)
    y = jnp.einsum('bhwi,io->bhwo', h, w3) + b3
    y = y + xres * x
    return jnp.transpose(y, (0, 3, 1, 2))[:, None]


if __name__ == "__main__":
    # hbnode config: in_channels = C, nhidden = NH, xres residual coefficient.
    B, C, H, W, NH = 2, 4, 16, 16, 32
    XRES = 0.5

    key = jax.random.PRNGKey(0)
    ks = jax.random.split(key, 8)
    # fc1: Conv2d(C+1, NH, k=1)          -> weight (in, out)
    w1 = 0.1 * jax.random.normal(ks[0], (C + 1, NH), jnp.float32)
    b1 = 0.1 * jax.random.normal(ks[1], (NH,), jnp.float32)
    # fc2: Conv2d(NH+1, NH, k=3, pad=1)  -> weight (ky, kx, in, out) (HWIO)
    w2 = 0.1 * jax.random.normal(ks[2], (3, 3, NH + 1, NH), jnp.float32)
    b2 = 0.1 * jax.random.normal(ks[3], (NH,), jnp.float32)
    # fc3: Conv2d(NH+1, C, k=1)          -> weight (in, out)
    w3 = 0.1 * jax.random.normal(ks[4], (NH + 1, C), jnp.float32)
    b3 = 0.1 * jax.random.normal(ks[5], (C,), jnp.float32)
    params = (w1, b1, w2, b2, w3, b3)

    x0 = jax.random.normal(ks[6], (B, 1, C, H, W), jnp.float32)
    t = jnp.float32(0.37)

    out = jax.block_until_ready(df_forward(t, x0, params, xres=XRES))
    ref = jax.block_until_ready(df_reference(t, x0, params, xres=XRES))

    assert out.shape == (B, 1, C, H, W)
    # bf16 MXU operands with f32 accumulation -> slightly looser tolerance
    # than the pure-f32 reference.
    err = jnp.max(jnp.abs(out - ref))
    assert jnp.allclose(out, ref, atol=3e-2, rtol=3e-2), f"max abs err {err}"

    print("KERNEL_OK")
</pallas_src>

<mosaic_0001>
module attributes {stable_mosaic.version = 11 : i64} {
  func.func @_df_kernel(%arg0: i32, %arg1: memref<1x4x256xf32, #tpu.memory_space<vmem>>, %arg2: memref<32x4xbf16, #tpu.memory_space<vmem>>, %arg3: memref<32x1xf32, #tpu.memory_space<vmem>>, %arg4: memref<32x288xbf16, #tpu.memory_space<vmem>>, %arg5: memref<32x256xf32, #tpu.memory_space<vmem>>, %arg6: memref<4x32xbf16, #tpu.memory_space<vmem>>, %arg7: memref<4x1xf32, #tpu.memory_space<vmem>>, %arg8: memref<1x4x256xf32, #tpu.memory_space<vmem>>) attributes {dimension_semantics = [#tpu.dimension_semantics<parallel>], iteration_bounds = array<i64: 2>, scalar_prefetch = 0 : i64, scratch_operands = 0 : i64, tpu.core_type = #tpu.core_type<tc>, window_params = [{transform_indices = @transform_0, window_bounds = array<i64: 1, 4, 256>}, {pipeline_mode = #tpu.pipeline_mode<synchronous>, transform_indices = @transform_1, window_bounds = array<i64: 32, 4>}, {pipeline_mode = #tpu.pipeline_mode<synchronous>, transform_indices = @transform_2, window_bounds = array<i64: 32, 1>}, {pipeline_mode = #tpu.pipeline_mode<synchronous>, transform_indices = @transform_3, window_bounds = array<i64: 32, 288>}, {pipeline_mode = #tpu.pipeline_mode<synchronous>, transform_indices = @transform_4, window_bounds = array<i64: 32, 256>}, {pipeline_mode = #tpu.pipeline_mode<synchronous>, transform_indices = @transform_5, window_bounds = array<i64: 4, 32>}, {pipeline_mode = #tpu.pipeline_mode<synchronous>, transform_indices = @transform_6, window_bounds = array<i64: 4, 1>}, {transform_indices = @transform_7, window_bounds = array<i64: 1, 4, 256>}]} {
    %c0 = arith.constant 0 : index
    %c0_0 = arith.constant 0 : index
    %c0_1 = arith.constant 0 : index
    %0 = vector.load %arg1[%c0, %c0_0, %c0_1] : memref<1x4x256xf32, #tpu.memory_space<vmem>>, vector<1x4x256xf32>
    %1 = vector.shape_cast %0 : vector<1x4x256xf32> to vector<4x256xf32>
    %c0_2 = arith.constant 0 : index
    %c0_3 = arith.constant 0 : index
    %2 = vector.load %arg2[%c0_2, %c0_3] : memref<32x4xbf16, #tpu.memory_space<vmem>>, vector<32x4xbf16>
    %3 = arith.truncf %1 : vector<4x256xf32> to vector<4x256xbf16>
    %cst = arith.constant dense<0.000000e+00> : vector<32x256xf32>
    %4 = tpu.matmul %2, %3, %cst {dimension_numbers = #tpu.dot_dimension_numbers<[1], [0], [0], [1], [0, 0, 1, 1], [], []>} : vector<32x4xbf16>, vector<4x256xbf16>, vector<32x256xf32> -> vector<32x256xf32>
    %c0_4 = arith.constant 0 : index
    %c0_5 = arith.constant 0 : index
    %5 = vector.load %arg3[%c0_4, %c0_5] : memref<32x1xf32, #tpu.memory_space<vmem>>, vector<32x1xf32>
    %6 = vector.broadcast %5 : vector<32x1xf32> to vector<32x256xf32>
    %7 = arith.addf %4, %6 : vector<32x256xf32>
    %cst_6 = arith.constant 0.000000e+00 : f32
    %8 = vector.broadcast %cst_6 : f32 to vector<32x256xf32>
    %9 = arith.maximumf %7, %8 : vector<32x256xf32>
    %10 = arith.truncf %9 : vector<32x256xf32> to vector<32x256xbf16>
    %cst_7 = arith.constant 0.000000e+00 : bf16
    %11 = vector.broadcast %cst_7 : bf16 to vector<32x17xbf16>
    %12 = tpu.concatenate %11, %10, %11 in 1 : vector<32x17xbf16>, vector<32x256xbf16>, vector<32x17xbf16> -> vector<32x290xbf16>
    %13 = tpu.iota {dimensions = array<i32: 1>} : vector<1x256xi32>
    %c16_i32 = arith.constant 16 : i32
    %c0_i32 = arith.constant 0 : i32
    %14 = arith.cmpi eq, %c16_i32, %c0_i32 : i32
    %c1_i32 = arith.constant 1 : i32
    %15 = arith.select %14, %c1_i32, %c16_i32 : i32
    %16 = vector.broadcast %15 : i32 to vector<1x256xi32>
    %17 = arith.remsi %13, %16 : vector<1x256xi32>
    %c0_i32_8 = arith.constant 0 : i32
    %18 = vector.broadcast %c0_i32_8 : i32 to vector<1x256xi32>
    %19 = arith.cmpi ne, %17, %18 : vector<1x256xi32>
    %c0_i32_9 = arith.constant 0 : i32
    %20 = vector.broadcast %c0_i32_9 : i32 to vector<1x256xi32>
    %21 = arith.cmpi slt, %17, %20 : vector<1x256xi32>
    %c0_i32_10 = arith.constant 0 : i32
    %22 = arith.cmpi slt, %15, %c0_i32_10 : i32
    %23 = vector.broadcast %22 : i1 to vector<1x256xi1>
    %24 = vector.broadcast %23 : vector<1x256xi1> to vector<1x256xi1>
    %25 = arith.xori %21, %24 : vector<1x256xi1>
    %26 = arith.andi %25, %19 : vector<1x256xi1>
    %27 = vector.broadcast %15 : i32 to vector<1x256xi32>
    %28 = arith.addi %17, %27 : vector<1x256xi32>
    %29 = arith.select %26, %28, %17 : vector<1x256xi1>, vector<1x256xi32>
    %30 = vector.extract_strided_slice %12 {offsets = [0, 0], sizes = [32, 256], strides = [1, 1]} : vector<32x290xbf16> to vector<32x256xbf16>
    %c1_i32_11 = arith.constant 1 : i32
    %31 = vector.broadcast %c1_i32_11 : i32 to vector<1x256xi32>
    %32 = arith.cmpi sge, %29, %31 : vector<1x256xi32>
    %cst_12 = arith.constant 0.000000e+00 : bf16
    %33 = vector.broadcast %cst_12 : bf16 to vector<32x256xbf16>
    %34 = vector.shape_cast %32 : vector<1x256xi1> to vector<1x256xi1>
    %35 = vector.broadcast %34 : vector<1x256xi1> to vector<32x256xi1>
    %36 = arith.select %35, %30, %33 : vector<32x256xi1>, vector<32x256xbf16>
    %37 = vector.extract_strided_slice %12 {offsets = [0, 1], sizes = [32, 256], strides = [1, 1]} : vector<32x290xbf16> to vector<32x256xbf16>
    %38 = vector.extract_strided_slice %12 {offsets = [0, 2], sizes = [32, 256], strides = [1, 1]} : vector<32x290xbf16> to vector<32x256xbf16>
    %c15_i32 = arith.constant 15 : i32
    %39 = vector.broadcast %c15_i32 : i32 to vector<1x256xi32>
    %40 = arith.cmpi slt, %29, %39 : vector<1x256xi32>
    %cst_13 = arith.constant 0.000000e+00 : bf16
    %41 = vector.broadcast %cst_13 : bf16 to vector<32x256xbf16>
    %42 = vector.shape_cast %40 : vector<1x256xi1> to vector<1x256xi1>
    %43 = vector.broadcast %42 : vector<1x256xi1> to vector<32x256xi1>
    %44 = arith.select %43, %38, %41 : vector<32x256xi1>, vector<32x256xbf16>
    %45 = vector.extract_strided_slice %12 {offsets = [0, 16], sizes = [32, 256], strides = [1, 1]} : vector<32x290xbf16> to vector<32x256xbf16>
    %c1_i32_14 = arith.constant 1 : i32
    %46 = vector.broadcast %c1_i32_14 : i32 to vector<1x256xi32>
    %47 = arith.cmpi sge, %29, %46 : vector<1x256xi32>
    %cst_15 = arith.constant 0.000000e+00 : bf16
    %48 = vector.broadcast %cst_15 : bf16 to vector<32x256xbf16>
    %49 = vector.shape_cast %47 : vector<1x256xi1> to vector<1x256xi1>
    %50 = vector.broadcast %49 : vector<1x256xi1> to vector<32x256xi1>
    %51 = arith.select %50, %45, %48 : vector<32x256xi1>, vector<32x256xbf16>
    %52 = vector.extract_strided_slice %12 {offsets = [0, 18], sizes = [32, 256], strides = [1, 1]} : vector<32x290xbf16> to vector<32x256xbf16>
    %c15_i32_16 = arith.constant 15 : i32
    %53 = vector.broadcast %c15_i32_16 : i32 to vector<1x256xi32>
    %54 = arith.cmpi slt, %29, %53 : vector<1x256xi32>
    %cst_17 = arith.constant 0.000000e+00 : bf16
    %55 = vector.broadcast %cst_17 : bf16 to vector<32x256xbf16>
    %56 = vector.shape_cast %54 : vector<1x256xi1> to vector<1x256xi1>
    %57 = vector.broadcast %56 : vector<1x256xi1> to vector<32x256xi1>
    %58 = arith.select %57, %52, %55 : vector<32x256xi1>, vector<32x256xbf16>
    %59 = vector.extract_strided_slice %12 {offsets = [0, 32], sizes = [32, 256], strides = [1, 1]} : vector<32x290xbf16> to vector<32x256xbf16>
    %c1_i32_18 = arith.constant 1 : i32
    %60 = vector.broadcast %c1_i32_18 : i32 to vector<1x256xi32>
    %61 = arith.cmpi sge, %29, %60 : vector<1x256xi32>
    %cst_19 = arith.constant 0.000000e+00 : bf16
    %62 = vector.broadcast %cst_19 : bf16 to vector<32x256xbf16>
    %63 = vector.shape_cast %61 : vector<1x256xi1> to vector<1x256xi1>
    %64 = vector.broadcast %63 : vector<1x256xi1> to vector<32x256xi1>
    %65 = arith.select %64, %59, %62 : vector<32x256xi1>, vector<32x256xbf16>
    %66 = vector.extract_strided_slice %12 {offsets = [0, 33], sizes = [32, 256], strides = [1, 1]} : vector<32x290xbf16> to vector<32x256xbf16>
    %67 = vector.extract_strided_slice %12 {offsets = [0, 34], sizes = [32, 256], strides = [1, 1]} : vector<32x290xbf16> to vector<32x256xbf16>
    %c15_i32_20 = arith.constant 15 : i32
    %68 = vector.broadcast %c15_i32_20 : i32 to vector<1x256xi32>
    %69 = arith.cmpi slt, %29, %68 : vector<1x256xi32>
    %cst_21 = arith.constant 0.000000e+00 : bf16
    %70 = vector.broadcast %cst_21 : bf16 to vector<32x256xbf16>
    %71 = vector.shape_cast %69 : vector<1x256xi1> to vector<1x256xi1>
    %72 = vector.broadcast %71 : vector<1x256xi1> to vector<32x256xi1>
    %73 = arith.select %72, %67, %70 : vector<32x256xi1>, vector<32x256xbf16>
    %74 = tpu.concatenate %36, %37, %44, %51, %10, %58, %65, %66, %73 in 0 : vector<32x256xbf16>, vector<32x256xbf16>, vector<32x256xbf16>, vector<32x256xbf16>, vector<32x256xbf16>, vector<32x256xbf16>, vector<32x256xbf16>, vector<32x256xbf16>, vector<32x256xbf16> -> vector<288x256xbf16>
    %c0_22 = arith.constant 0 : index
    %c0_23 = arith.constant 0 : index
    %75 = vector.load %arg4[%c0_22, %c0_23] : memref<32x288xbf16, #tpu.memory_space<vmem>>, vector<32x288xbf16>
    %cst_24 = arith.constant dense<0.000000e+00> : vector<32x256xf32>
    %76 = tpu.matmul %75, %74, %cst_24 {dimension_numbers = #tpu.dot_dimension_numbers<[1], [0], [0], [1], [0, 0, 1, 1], [], []>} : vector<32x288xbf16>, vector<288x256xbf16>, vector<32x256xf32> -> vector<32x256xf32>
    %c0_25 = arith.constant 0 : index
    %c0_26 = arith.constant 0 : index
    %77 = vector.load %arg5[%c0_25, %c0_26] : memref<32x256xf32, #tpu.memory_space<vmem>>, vector<32x256xf32>
    %78 = arith.addf %76, %77 : vector<32x256xf32>
    %cst_27 = arith.constant 0.000000e+00 : f32
    %79 = vector.broadcast %cst_27 : f32 to vector<32x256xf32>
    %80 = arith.maximumf %78, %79 : vector<32x256xf32>
    %c0_28 = arith.constant 0 : index
    %c0_29 = arith.constant 0 : index
    %81 = vector.load %arg6[%c0_28, %c0_29] : memref<4x32xbf16, #tpu.memory_space<vmem>>, vector<4x32xbf16>
    %82 = arith.truncf %80 : vector<32x256xf32> to vector<32x256xbf16>
    %cst_30 = arith.constant dense<0.000000e+00> : vector<4x256xf32>
    %83 = tpu.matmul %81, %82, %cst_30 {dimension_numbers = #tpu.dot_dimension_numbers<[1], [0], [0], [1], [0, 0, 1, 1], [], []>} : vector<4x32xbf16>, vector<32x256xbf16>, vector<4x256xf32> -> vector<4x256xf32>
    %c0_31 = arith.constant 0 : index
    %c0_32 = arith.constant 0 : index
    %84 = vector.load %arg7[%c0_31, %c0_32] : memref<4x1xf32, #tpu.memory_space<vmem>>, vector<4x1xf32>
    %85 = vector.broadcast %84 : vector<4x1xf32> to vector<4x256xf32>
    %86 = arith.addf %83, %85 : vector<4x256xf32>
    %cst_33 = arith.constant 5.000000e-01 : f32
    %87 = vector.broadcast %cst_33 : f32 to vector<4x256xf32>
    %88 = arith.mulf %87, %1 : vector<4x256xf32>
    %89 = arith.addf %86, %88 : vector<4x256xf32>
    %c0_34 = arith.constant 0 : index
    %c0_35 = arith.constant 0 : index
    %c0_36 = arith.constant 0 : index
    %90 = vector.load %arg8[%c0_34, %c0_35, %c0_36] : memref<1x4x256xf32, #tpu.memory_space<vmem>>, vector<1x4x256xf32>
    %91 = vector.shape_cast %90 : vector<1x4x256xf32> to vector<4x256xf32>
    %92 = vector.shape_cast %89 : vector<4x256xf32> to vector<1x4x256xf32>
    tpu.vector_store %arg8[%c0_34, %c0_35, %c0_36], %92 {strides = array<i32>} : memref<1x4x256xf32, #tpu.memory_space<vmem>>, vector<1x4x256xf32>,
    return
  }
  func.func @transform_0(%arg0: i32) -> (i32, i32, i32) {
    %c0_i32 = arith.constant 0 : i32
    %c0_i32_0 = arith.constant 0 : i32
    %c0_i32_1 = arith.constant 0 : i32
    return %arg0, %c0_i32, %c0_i32_0 : i32, i32, i32
  }
  func.func @transform_1(%arg0: i32) -> (i32, i32) {
    %c0_i32 = arith.constant 0 : i32
    %c0_i32_0 = arith.constant 0 : i32
    %c0_i32_1 = arith.constant 0 : i32
    return %c0_i32, %c0_i32_0 : i32, i32
  }
  func.func @transform_2(%arg0: i32) -> (i32, i32) {
    %c0_i32 = arith.constant 0 : i32
    %c0_i32_0 = arith.constant 0 : i32
    %c0_i32_1 = arith.constant 0 : i32
    return %c0_i32, %c0_i32_0 : i32, i32
  }
  func.func @transform_3(%arg0: i32) -> (i32, i32) {
    %c0_i32 = arith.constant 0 : i32
    %c0_i32_0 = arith.constant 0 : i32
    %c0_i32_1 = arith.constant 0 : i32
    return %c0_i32, %c0_i32_0 : i32, i32
  }
  func.func @transform_4(%arg0: i32) -> (i32, i32) {
    %c0_i32 = arith.constant 0 : i32
    %c0_i32_0 = arith.constant 0 : i32
    %c0_i32_1 = arith.constant 0 : i32
    return %c0_i32, %c0_i32_0 : i32, i32
  }
  func.func @transform_5(%arg0: i32) -> (i32, i32) {
    %c0_i32 = arith.constant 0 : i32
    %c0_i32_0 = arith.constant 0 : i32
    %c0_i32_1 = arith.constant 0 : i32
    return %c0_i32, %c0_i32_0 : i32, i32
  }
  func.func @transform_6(%arg0: i32) -> (i32, i32) {
    %c0_i32 = arith.constant 0 : i32
    %c0_i32_0 = arith.constant 0 : i32
    %c0_i32_1 = arith.constant 0 : i32
    return %c0_i32, %c0_i32_0 : i32, i32
  }
  func.func @transform_7(%arg0: i32) -> (i32, i32, i32) {
    %c0_i32 = arith.constant 0 : i32
    %c0_i32_0 = arith.constant 0 : i32
    %c0_i32_1 = arith.constant 0 : i32
    return %arg0, %c0_i32, %c0_i32_0 : i32, i32, i32
  }
}

</mosaic_0001>

<llo_original>
// kernel: df_forward.1
$region0: #{df_forward.1}
  #allocation0 [shape = 'u32[]', space=smem, size = 0x4, offset = 0x4, fixed_abs, tag = 'smem constant byte address 0x4 - core index']
  #allocation1 [shape = 'u32[144,128]{1,0:T(1,128)}', space=vmem, size = 0x12000, scoped, tag = 'internal scratch']
  %s0 = inlined_call_operand.vmem [shape: f32[2,4,256], index: 0, kind: input, shape index: {}]
  %s1 = inlined_call_operand.vmem [shape: bf16[32,4], index: 1, kind: input, shape index: {}]
  %s2 = inlined_call_operand.vmem [shape: f32[32,1], index: 2, kind: input, shape index: {}]
  %s3 = inlined_call_operand.vmem [shape: bf16[32,288], index: 3, kind: input, shape index: {}]
  %s4 = inlined_call_operand.vmem [shape: f32[32,256], index: 4, kind: input, shape index: {}]
  %s5 = inlined_call_operand.vmem [shape: bf16[4,32], index: 5, kind: input, shape index: {}]
  %s6 = inlined_call_operand.vmem [shape: f32[4,1], index: 6, kind: input, shape index: {}]
  %s7 = inlined_call_operand.vmem [shape: f32[2,4,256], index: 7, kind: output, shape index: {}]
  %s8 = sld [smem:[#allocation0]]
  $region61: #{df_forward.1} parent=0
    _
  %s10 = ssub.s32 1, %s8
  %s11 = scalar_select 0, %s10, %s8
  loop: start=0, step=1, limit=4
  $region2: #{df_forward.1} parent=0 // loop_pre_header
    _
  $region3: #{df_forward.1} parent=0 // loop_header
    %s13 = sphi 0, %s17
    %p14 = scmp.ge.s32.totalorder %s13, 4
    %s23 = sphi 0, %s25
    %s26 = sphi 0, %s23
    %s27 = sphi 0, %s26
    %s43 = sphi 0, %s27
    %s47 = sphi 0, %s47
    %s49 = sphi 0, %s47
    %s50 = sphi 0, %s49
    %s64 = sphi 0, %s50
    %s68 = sphi 0, %s68
    %s70 = sphi 0, %s68
    %s71 = sphi 0, %s70
    %s85 = sphi 0, %s71
    %s89 = sphi 0, %s89
    %s91 = sphi 0, %s89
    %s92 = sphi 0, %s91
    %s106 = sphi 0, %s92
    %s110 = sphi 0, %s110
    %s112 = sphi 0, %s110
    %s113 = sphi 0, %s112
    %s127 = sphi 0, %s113
    %s131 = sphi 0, %s131
    %s133 = sphi 0, %s131
    %s134 = sphi 0, %s133
    %s148 = sphi 0, %s134
    %s152 = sphi 0, %s152
    %s154 = sphi 0, %s152
    %s155 = sphi 0, %s154
    %s169 = sphi 0, %s155
    %s175 = sphi 0, %s177
    %s178 = sphi 0, %s175
    %s179 = sphi 0, %s178
    %s195 = sphi 0, %s179
  $region4: #{df_forward.1} parent=0 // loop_header_branch
    %16 = sbr.rel (%p14) target = $region8
  $region5: #{df_forward.1} parent=0 // loop_body
    %s18 = ssub.s32 %s13, 1
    %s19 = ssub.s32 %s13, 2
    %s20 = sadd.s32 %s13, 1
    %s21 = ssub.s32 %s13, %s20
    %p22 = scmp.eq.s32.totalorder %s21, 0
    %s24 = sadd.s32 %s23, 1
    %s25 = scalar_select %p22, %s23, %s24
    %p28 = pneg %p22
    %p29 = scmp.eq.s32.totalorder %s13, 1
    %p30 = por %p28, %p29
    %p31 = scmp.ne.s32.totalorder %s23, %s26
    %p32 = scmp.eq.s32.totalorder %s13, 0
    %p33 = por %p31, %p32
    %p34 = scmp.ne.s32.totalorder %s23, %s26
    %p35 = scmp.eq.s32.totalorder %s18, 1
    %p36 = por %p34, %p35
    %p37 = scmp.ne.s32.totalorder %s26, %s27
    %p38 = scmp.eq.s32.totalorder %s18, 0
    %p39 = por %p37, %p38
    %p40 = scmp.ne.s32.totalorder %s26, %s27
    %p41 = scmp.eq.s32.totalorder %s19, 1
    %p42 = por %p40, %p41
    %p44 = scmp.ne.s32.totalorder %s27, %s43
    %p45 = scmp.eq.s32.totalorder %s19, 0
    %p46 = por %p44, %p45
    %s48 = sadd.s32 %s47, 1
    %p51 = scmp.eq.s32.totalorder %s13, 1
    %p52 = scmp.ne.s32.totalorder %s47, %s49
    %p53 = scmp.eq.s32.totalorder %s13, 0
    %p54 = por %p52, %p53
    %p55 = scmp.ne.s32.totalorder %s47, %s49
    %p56 = scmp.eq.s32.totalorder %s18, 1
    %p57 = por %p55, %p56
    %p58 = scmp.ne.s32.totalorder %s49, %s50
    %p59 = scmp.eq.s32.totalorder %s18, 0
    %p60 = por %p58, %p59
    %p61 = scmp.ne.s32.totalorder %s49, %s50
    %p62 = scmp.eq.s32.totalorder %s19, 1
    %p63 = por %p61, %p62
    %p65 = scmp.ne.s32.totalorder %s50, %s64
    %p66 = scmp.eq.s32.totalorder %s19, 0
    %p67 = por %p65, %p66
    %s69 = sadd.s32 %s68, 1
    %p72 = scmp.eq.s32.totalorder %s13, 1
    %p73 = scmp.ne.s32.totalorder %s68, %s70
    %p74 = scmp.eq.s32.totalorder %s13, 0
    %p75 = por %p73, %p74
    %p76 = scmp.ne.s32.totalorder %s68, %s70
    %p77 = scmp.eq.s32.totalorder %s18, 1
    %p78 = por %p76, %p77
    %p79 = scmp.ne.s32.totalorder %s70, %s71
    %p80 = scmp.eq.s32.totalorder %s18, 0
    %p81 = por %p79, %p80
    %p82 = scmp.ne.s32.totalorder %s70, %s71
    %p83 = scmp.eq.s32.totalorder %s19, 1
    %p84 = por %p82, %p83
    %p86 = scmp.ne.s32.totalorder %s71, %s85
    %p87 = scmp.eq.s32.totalorder %s19, 0
    %p88 = por %p86, %p87
    %s90 = sadd.s32 %s89, 1
    %p93 = scmp.eq.s32.totalorder %s13, 1
    %p94 = scmp.ne.s32.totalorder %s89, %s91
    %p95 = scmp.eq.s32.totalorder %s13, 0
    %p96 = por %p94, %p95
    %p97 = scmp.ne.s32.totalorder %s89, %s91
    %p98 = scmp.eq.s32.totalorder %s18, 1
    %p99 = por %p97, %p98
    %p100 = scmp.ne.s32.totalorder %s91, %s92
    %p101 = scmp.eq.s32.totalorder %s18, 0
    %p102 = por %p100, %p101
    %p103 = scmp.ne.s32.totalorder %s91, %s92
    %p104 = scmp.eq.s32.totalorder %s19, 1
    %p105 = por %p103, %p104
    %p107 = scmp.ne.s32.totalorder %s92, %s106
    %p108 = scmp.eq.s32.totalorder %s19, 0
    %p109 = por %p107, %p108
    %s111 = sadd.s32 %s110, 1
    %p114 = scmp.eq.s32.totalorder %s13, 1
    %p115 = scmp.ne.s32.totalorder %s110, %s112
    %p116 = scmp.eq.s32.totalorder %s13, 0
    %p117 = por %p115, %p116
    %p118 = scmp.ne.s32.totalorder %s110, %s112
    %p119 = scmp.eq.s32.totalorder %s18, 1
    %p120 = por %p118, %p119
    %p121 = scmp.ne.s32.totalorder %s112, %s113
    %p122 = scmp.eq.s32.totalorder %s18, 0
    %p123 = por %p121, %p122
    %p124 = scmp.ne.s32.totalorder %s112, %s113
    %p125 = scmp.eq.s32.totalorder %s19, 1
    %p126 = por %p124, %p125
    %p128 = scmp.ne.s32.totalorder %s113, %s127
    %p129 = scmp.eq.s32.totalorder %s19, 0
    %p130 = por %p128, %p129
    %s132 = sadd.s32 %s131, 1
    %p135 = scmp.eq.s32.totalorder %s13, 1
    %p136 = scmp.ne.s32.totalorder %s131, %s133
    %p137 = scmp.eq.s32.totalorder %s13, 0
    %p138 = por %p136, %p137
    %p139 = scmp.ne.s32.totalorder %s131, %s133
    %p140 = scmp.eq.s32.totalorder %s18, 1
    %p141 = por %p139, %p140
    %p142 = scmp.ne.s32.totalorder %s133, %s134
    %p143 = scmp.eq.s32.totalorder %s18, 0
    %p144 = por %p142, %p143
    %p145 = scmp.ne.s32.totalorder %s133, %s134
    %p146 = scmp.eq.s32.totalorder %s19, 1
    %p147 = por %p145, %p146
    %p149 = scmp.ne.s32.totalorder %s134, %s148
    %p150 = scmp.eq.s32.totalorder %s19, 0
    %p151 = por %p149, %p150
    %s153 = sadd.s32 %s152, 1
    %p156 = scmp.eq.s32.totalorder %s13, 1
    %p157 = scmp.ne.s32.totalorder %s152, %s154
    %p158 = scmp.eq.s32.totalorder %s13, 0
    %p159 = por %p157, %p158
    %p160 = scmp.ne.s32.totalorder %s152, %s154
    %p161 = scmp.eq.s32.totalorder %s18, 1
    %p162 = por %p160, %p161
    %p163 = scmp.ne.s32.totalorder %s154, %s155
    %p164 = scmp.eq.s32.totalorder %s18, 0
    %p165 = por %p163, %p164
    %p166 = scmp.ne.s32.totalorder %s154, %s155
    %p167 = scmp.eq.s32.totalorder %s19, 1
    %p168 = por %p166, %p167
    %p170 = scmp.ne.s32.totalorder %s155, %s169
    %p171 = scmp.eq.s32.totalorder %s19, 0
    %p172 = por %p170, %p171
    %s173 = ssub.s32 %s13, %s20
    %p174 = scmp.eq.s32.totalorder %s173, 0
    %s176 = sadd.s32 %s175, 1
    %s177 = scalar_select %p174, %s175, %s176
    %p180 = pneg %p174
    %p181 = scmp.eq.s32.totalorder %s13, 1
    %p182 = por %p180, %p181
    %p183 = scmp.ne.s32.totalorder %s175, %s178
    %p184 = scmp.eq.s32.totalorder %s13, 0
    %p185 = por %p183, %p184
    %p186 = scmp.ne.s32.totalorder %s175, %s178
    %p187 = scmp.eq.s32.totalorder %s18, 1
    %p188 = por %p186, %p187
    %p189 = scmp.ne.s32.totalorder %s178, %s179
    %p190 = scmp.eq.s32.totalorder %s18, 0
    %p191 = por %p189, %p190
    %p192 = scmp.ne.s32.totalorder %s178, %s179
    %p193 = scmp.eq.s32.totalorder %s19, 1
    %p194 = por %p192, %p193
    %p196 = scmp.ne.s32.totalorder %s179, %s195
    %p197 = scmp.eq.s32.totalorder %s19, 0
    %p198 = por %p196, %p197
    %p199 = scmp.le.s32.totalorder 1, %s13
    %p200 = scmp.lt.s32.totalorder %s13, 3
    %p201 = pnand %p199, %p200
    %p202 = pneg %p201
    // Predicated region
    $region9: #{df_forward.1} parent=5 // pred_check
      _
    $region10: #{df_forward.1} parent=5 // pred_check_branch
      %204 = sbr.rel (%p201) target = $region12
    $region11: #{df_forward.1} parent=5 // pred_region
      %s205 = ssub.s32 %s13, 1
      // Predicated region
      $region13: #{df_forward.1} parent=11 // pred_check
        %p206 = pneg %p60
      $region14: #{df_forward.1} parent=11 // pred_check_branch
        %208 = sbr.rel (%p206) target = $region16
      $region15: #{df_forward.1} parent=11 // pred_region
        _
      $region16: #{df_forward.1} parent=11 // pred_fallthru
        _
      // Predicated region
      $region17: #{df_forward.1} parent=11 // pred_check
        %p209 = pneg %p81
      $region18: #{df_forward.1} parent=11 // pred_check_branch
        %211 = sbr.rel (%p209) target = $region20
      $region19: #{df_forward.1} parent=11 // pred_region
        _
      $region20: #{df_forward.1} parent=11 // pred_fallthru
        _
      // Predicated region
      $region21: #{df_forward.1} parent=11 // pred_check
        %p212 = pneg %p102
      $region22: #{df_forward.1} parent=11 // pred_check_branch
        %214 = sbr.rel (%p212) target = $region24
      $region23: #{df_forward.1} parent=11 // pred_region
        _
      $region24: #{df_forward.1} parent=11 // pred_fallthru
        _
      // Predicated region
      $region25: #{df_forward.1} parent=11 // pred_check
        %p215 = pneg %p123
      $region26: #{df_forward.1} parent=11 // pred_check_branch
        %217 = sbr.rel (%p215) target = $region28
      $region27: #{df_forward.1} parent=11 // pred_region
        _
      $region28: #{df_forward.1} parent=11 // pred_fallthru
        _
      // Predicated region
      $region29: #{df_forward.1} parent=11 // pred_check
        %p218 = pneg %p144
      $region30: #{df_forward.1} parent=11 // pred_check_branch
        %220 = sbr.rel (%p218) target = $region32
      $region31: #{df_forward.1} parent=11 // pred_region
        _
      $region32: #{df_forward.1} parent=11 // pred_fallthru
        _
      // Predicated region
      $region33: #{df_forward.1} parent=11 // pred_check
        %p221 = pneg %p165
      $region34: #{df_forward.1} parent=11 // pred_check_branch
        %223 = sbr.rel (%p221) target = $region36
      $region35: #{df_forward.1} parent=11 // pred_region
        _
      $region36: #{df_forward.1} parent=11 // pred_fallthru
        _
    $region12: #{df_forward.1} parent=5 // pred_fallthru
      _
    %p224 = scmp.lt.s32.totalorder %s13, 2
    // Predicated region
    $region37: #{df_forward.1} parent=5 // pred_check
      %p225 = pneg %p224
    $region38: #{df_forward.1} parent=5 // pred_check_branch
      %227 = sbr.rel (%p225) target = $region40
    $region39: #{df_forward.1} parent=5 // pred_region
      // Predicated region
      $region41: #{df_forward.1} parent=39 // pred_check
        %p228 = pneg %p33
      $region42: #{df_forward.1} parent=39 // pred_check_branch
        %230 = sbr.rel (%p228) target = $region44
      $region43: #{df_forward.1} parent=39 // pred_region
        %p231 = scmp.lt.s32.totalorder %s13, 1
        %s232 = scalar_select %p231, %s13, 1
        %s233 = smul.addr %s232, 2
        %s234 = smul.addr %s233, 4
        %s235 = scalar_lea.vmem %s0, %s234
      $region44: #{df_forward.1} parent=39 // pred_fallthru
        _
    $region40: #{df_forward.1} parent=5 // pred_fallthru
      _
    %p236 = scmp.le.s32.totalorder 1, %s13
    %p237 = scmp.lt.s32.totalorder %s13, 3
    %p238 = pnand %p236, %p237
    %p239 = pneg %p238
    // Predicated region
    $region45: #{df_forward.1} parent=5 // pred_check
      _
    $region46: #{df_forward.1} parent=5 // pred_check_branch
      %241 = sbr.rel (%p238) target = $region48
    $region47: #{df_forward.1} parent=5 // pred_region
      %s242 = ssub.s32 %s13, 1
      %p243 = scmp.lt.s32.totalorder %s18, 1
      %s244 = scalar_select %p243, %s18, 1
      %s245 = smul.addr %s244, 2
      %s246 = smul.addr %s245, 4
      %s247 = scalar_lea.vmem %s0, %s246
      %p248 = pneg %p39
      %p249 = pneg %p36
      %p250 = pneg %p60
      %p251 = pneg %p57
      %p252 = pneg %p81
      %p253 = pneg %p78
      %p254 = pneg %p102
      %p255 = pneg %p99
      %p256 = pneg %p123
      %p257 = pneg %p120
      %p258 = pneg %p144
      %p259 = pneg %p141
      %p260 = pneg %p165
      %p261 = pneg %p162
      %p262 = pneg %p191
      %p263 = pneg %p188
      %p264 = scmp.lt.s32.totalorder %s18, 1
      %s265 = scalar_select %p264, %s18, 1
      %s266 = smul.addr %s265, 2
      %s267 = smul.addr %s266, 4
      %s268 = scalar_lea.vmem %s7, %s267
      %p269 = scmp.lt.s32.totalorder %s18, 1
      %s270 = scalar_select %p269, %s18, 1
      %s271 = smul.addr %s270, 2
      %s272 = smul.addr %s271, 4
      %s273 = scalar_lea.vmem %s0, %s272
      %p274 = scmp.lt.s32.totalorder %s18, 1
      %s275 = scalar_select %p274, %s18, 1
      %s276 = smul.addr %s275, 2
      %s277 = smul.addr %s276, 4
      %s278 = scalar_lea.vmem %s7, %s277
      %v282 = vld [vmem:[%s273] sm:$0xff]
      %v283 = vld [vmem:[%s1] sm:$0xf]
      %v284 = vld [vmem:[%s1 + $0x4] sm:$0xf]
      %v285 = vld [vmem:[%s1 + $0x8] sm:$0xf]
      %v286 = vld [vmem:[%s1 + $0xc] sm:$0xf]
      %v288 = vcombine.high %v282, %v282
      %v290 = vpack.c.bf16 %v282, %v282
      %v291 = vpack.c.bf16 %v288, %v288
      %v292 = vld [vmem:[%s2] sm:$0xff]
      %v293 = vld [vmem:[%s2 + $0x8] sm:$0xff]
      %v294 = vld [vmem:[%s2 + $0x10] sm:$0xff]
      %v295 = vld [vmem:[%s2 + $0x18] sm:$0xff]
      %297 = vset.pattern.permute.xlu0 0
      %298 = vperm.xlu0 %297, %v292
      %v299 = vpop.permute.xlu0 %298
      %302 = vset.pattern.permute.xlu0 0
      %303 = vperm.xlu0 %302, %v293
      %v304 = vpop.permute.xlu0 %303
      %307 = vset.pattern.permute.xlu0 0
      %308 = vperm.xlu0 %307, %v294
      %v309 = vpop.permute.xlu0 %308
      %312 = vset.pattern.permute.xlu0 0
      %313 = vperm.xlu0 %312, %v295
      %v314 = vpop.permute.xlu0 %313
      %v320 = vunpack.c.l.b16 %v283
      %v321 = vunpack.c.l.b16 %v284
      %v322 = vunpack.c.l.b16 %v285
      %v323 = vunpack.c.l.b16 %v286
      %v324 = vpack.c.b16 %v321, %v320
      %v325 = vpack.c.b16 %v323, %v322
      %vm326 = vcmask 31744
      %v328 = vsel %vm326, %v324, 0
      %v331 = vsel %vm326, %v325, 0
      %vm333 = vcmask 1041408
      %v335 = vsel %vm333, %v290, 0
      %v338 = vsel %vm333, %v291, 0
      %340 = vmatprep.subr.bf16.mxu0 %v338
      %341 = vmatpush1.bf16.msra.mxu0 %v335
      %342 = vmatprep.subr.bf16.mxu0 0
      %343 = vmatpush1.bf16.msra.mxu0 0
      %344 = vmatprep.subr.bf16.mxu0 0
      %345 = vmatpush1.bf16.msra.mxu0 0
      %346 = vmatprep.subr.bf16.mxu0 0
      %347 = vmatpush1.bf16.msra.mxu0 0
      %348 = vmatprep.subr.bf16.mxu0 0
      %349 = vmatpush1.bf16.msra.mxu0 0
      %350 = vmatprep.subr.bf16.mxu0 0
      %351 = vmatpush1.bf16.msra.mxu0 0
      %352 = vmatprep.subr.bf16.mxu0 0
      %353 = vmatpush1.bf16.msra.mxu0 0
      %354 = vmatprep.subr.bf16.mxu0 0
      %355 = vmatpush1.bf16.msra.mxu0 0
      %356 = vmatprep.subr.bf16.mxu0 0
      %357 = vmatpush1.bf16.msra.mxu0 0
      %358 = vmatprep.subr.bf16.mxu0 0
      %359 = vmatpush1.bf16.msra.mxu0 0
      %360 = vmatprep.subr.bf16.mxu0 0
      %361 = vmatpush1.bf16.msra.mxu0 0
      %362 = vmatprep.subr.bf16.mxu0 0
      %363 = vmatpush1.bf16.msra.mxu0 0
      %364 = vmatprep.subr.bf16.mxu0 0
      %365 = vmatpush1.bf16.msra.mxu0 0
      %366 = vmatprep.subr.bf16.mxu0 0
      %367 = vmatpush1.bf16.msra.mxu0 0
      %368 = vmatprep.subr.bf16.mxu0 0
      %369 = vmatpush1.bf16.msra.mxu0 0
      %370 = vmatprep.subr.bf16.mxu0 0
      %371 = vmatpush1.bf16.msra.mxu0 0
      %372 = vmatprep.mubr.bf16.mxu0 0
      %373 = vmatmul.mubr.bf16.gmra.mrb[0].mxu0 %v328
      %v374 = vpop.f32.mrb[0].mxu0
      %v375 = vadd.f32 %v299, %v374
      %v376 = vpop.f32.mrb[0].mxu0
      %v377 = vadd.f32 %v299, %v376
      %v378 = vpop.f32.mrb[0].mxu0
      %v379 = vadd.f32 %v304, %v378
      %v380 = vpop.f32.mrb[0].mxu0
      %v381 = vadd.f32 %v304, %v380
      %382 = vmatprep.mubr.bf16.mxu0 0
      %383 = vmatmul.mubr.bf16.gmra.mrb[0].mxu0 %v331
      %v384 = vpop.f32.mrb[0].mxu0
      %v385 = vadd.f32 %v309, %v384
      %v386 = vpop.f32.mrb[0].mxu0
      %v387 = vadd.f32 %v309, %v386
      %v388 = vpop.f32.mrb[0].mxu0
      %v389 = vadd.f32 %v314, %v388
      %v390 = vpop.f32.mrb[0].mxu0
      %v391 = vadd.f32 %v314, %v390
      %392 = vdwg.mxu0
      %v393 = vmax.f32 %v375, 0.0
      %v394 = vmax.f32 %v377, 0.0
      %v395 = vmax.f32 %v379, 0.0
      %v396 = vmax.f32 %v381, 0.0
      %v397 = vmax.f32 %v385, 0.0
      %v398 = vmax.f32 %v387, 0.0
      %v399 = vmax.f32 %v389, 0.0
      %v400 = vmax.f32 %v391, 0.0
      %v401 = vpack.c.bf16 %v395, %v393
      %v402 = vpack.c.bf16 %v396, %v394
      %v403 = vpack.c.bf16 %v399, %v397
      %v404 = vpack.c.bf16 %v400, %v398
      %409 = vrot.lane.b32.xlu0 %v401, 17
      %v410 = vpop.permute.xlu0 %409
      %411 = vrot.lane.b32.xlu0 %v402, 17
      %v412 = vpop.permute.xlu0 %411
      %413 = vrot.lane.b32.xlu0 %v403, 17
      %v414 = vpop.permute.xlu0 %413
      %415 = vrot.lane.b32.xlu0 %v404, 17
      %v416 = vpop.permute.xlu0 %415
      %vm417 = vcmask 138240
      %v418 = vsel %vm417, %v410, %v412
      %v419 = vsel %vm417, %v414, %v416
      %vm422 = vcmask 138240
      %v425 = vsel %vm422, 0, %v410
      %v428 = vsel %vm422, 0, %v414
      %v431 = vsel %vm422, %v412, 0
      %v434 = vsel %vm422, %v416, 0
      %v436 = vlaneseq
      %v437 = vand.u32 %v436, 127
      %v438 = vadd.s32 %v437, 128
      %vm439 = vcmp.lt.s32.totalorder %v437, 0
      %v440 = vsub.s32 0, %v437
      %v441 = vsel %vm439, %v440, %v437
      %v442 = vshrl.u32 %v441, 4
      %v443 = vand.u32 %v441, 15
      %v444 = vsub.s32 0, %v443
      %v445 = vsel %vm439, %v444, %v443
      %vm446 = vcmp.lt.s32.totalorder %v438, 0
      %v447 = vsub.s32 0, %v438
      %v448 = vsel %vm446, %v447, %v438
      %v449 = vshrl.u32 %v448, 4
      %v450 = vand.u32 %v448, 15
      %v451 = vsub.s32 0, %v450
      %v452 = vsel %vm446, %v451, %v450
      %vm453 = vcmp.ne.s32.totalorder %v445, 0
      %vm454 = vcmp.ne.s32.totalorder %v452, 0
      %vm455 = vcmp.lt.s32.totalorder %v445, 0
      %vm456 = vcmp.lt.s32.totalorder %v452, 0
      %vm457 = vmand %vm455, %vm453
      %vm458 = vmand %vm456, %vm454
      %v459 = vadd.s32 %v445, 16
      %v460 = vadd.s32 %v452, 16
      %v461 = vsel %vm457, %v459, %v445
      %v462 = vsel %vm458, %v460, %v452
      %vm463 = vcmp.ge.s32.totalorder %v461, 1
      %vm464 = vcmp.ge.s32.totalorder %v462, 1
      %v465 = vsel %vm463, 1, 0
      %v466 = vsel %vm464, 1, 0
      %vm467 = vcmp.eq.s32.totalorder %v465, 1
      %vm468 = vcmp.eq.s32.totalorder %v466, 1
      %vm469 = vmpackc.low %vm468, %vm467
      %v470 = vsel %vm469, 65537, 0
      %v471 = vlaneseq
      %v472 = vshrl.u32 %v471, 7
      %v473 = vsub.s32 0, %v472
      %v474 = vrot.slane %v470, %v473
      %v475 = vlaneseq
      %v476 = vshrl.u32 %v475, 7
      %v477 = vsub.s32 4, %v476
      %v478 = vrot.slane %v470, %v477
      %vm479 = vcmp.ne.s16.totalorder %v474, 0
      %vm480 = vcmp.ne.s16.totalorder %v478, 0
      %v481 = vsel %vm479, %v425, 0
      %v482 = vsel %vm480, %v418, 0
      %v483 = vsel %vm479, %v428, 0
      %v484 = vsel %vm480, %v419, 0
      %vm485 = vcmp.lt.s32.totalorder %v461, 15
      %vm486 = vcmp.lt.s32.totalorder %v462, 15
      %v487 = vsel %vm485, 1, 0
      %v488 = vsel %vm486, 1, 0
      %vm489 = vcmp.eq.s32.totalorder %v487, 1
      %vm490 = vcmp.eq.s32.totalorder %v488, 1
      %vm491 = vmpackc.low %vm490, %vm489
      %v492 = vsel %vm491, 65537, 0
      %v493 = vlaneseq
      %v494 = vshrl.u32 %v493, 7
      %v495 = vsub.s32 0, %v494
      %v496 = vrot.slane %v492, %v495
      %v497 = vlaneseq
      %v498 = vshrl.u32 %v497, 7
      %v499 = vsub.s32 4, %v498
      %v500 = vrot.slane %v492, %v499
      %501 = vrot.lane.b32.xlu0 %v496, 2
      %v502 = vpop.permute.xlu0 %501
      %503 = vrot.lane.b32.xlu0 %v500, 2
      %v504 = vpop.permute.xlu0 %503
      %vm505 = vcmask 15360
      %v506 = vsel %vm505, %v502, %v504
      %vm507 = vcmp.ne.s16.totalorder %v502, 0
      %vm508 = vcmp.ne.s16.totalorder %v506, 0
      %vm509 = vcmp.ne.s16.totalorder %v504, 0
      %v510 = vsel %vm507, %v425, 0
      %v511 = vsel %vm508, %v418, 0
      %v512 = vsel %vm509, %v431, 0
      %v513 = vsel %vm507, %v428, 0
      %v514 = vsel %vm508, %v419, 0
      %v515 = vsel %vm509, %v434, 0
      %516 = vrot.lane.b32.xlu0 %v474, 16
      %v517 = vpop.permute.xlu0 %516
      %518 = vrot.lane.b32.xlu0 %v478, 16
      %v519 = vpop.permute.xlu0 %518
      %vm520 = vcmask 130048
      %v521 = vsel %vm520, %v517, %v519
      %vm522 = vcmp.ne.s16.totalorder %v517, 0
      %vm523 = vcmp.ne.s16.totalorder %v521, 0
      %vm524 = vcmp.ne.s16.totalorder %v519, 0
      %v525 = vsel %vm522, %v425, 0
      %v526 = vsel %vm523, %v418, 0
      %v527 = vsel %vm524, %v431, 0
      %v528 = vsel %vm522, %v428, 0
      %v529 = vsel %vm523, %v419, 0
      %v530 = vsel %vm524, %v434, 0
      %531 = vrot.lane.b32.xlu0 %v496, 18
      %v532 = vpop.permute.xlu0 %531
      %533 = vrot.lane.b32.xlu0 %v500, 18
      %v534 = vpop.permute.xlu0 %533
      %vm535 = vcmask 146432
      %v536 = vsel %vm535, %v532, %v534
      %vm537 = vcmp.ne.s16.totalorder %v532, 0
      %vm538 = vcmp.ne.s16.totalorder %v536, 0
      %vm539 = vcmp.ne.s16.totalorder %v534, 0
      %v540 = vsel %vm537, %v425, 0
      %v541 = vsel %vm538, %v418, 0
      %v542 = vsel %vm539, %v431, 0
      %v543 = vsel %vm537, %v428, 0
      %v544 = vsel %vm538, %v419, 0
      %v545 = vsel %vm539, %v434, 0
      %546 = vrot.lane.b32.xlu0 %v474, 32
      %v547 = vpop.permute.xlu0 %546
      %548 = vrot.lane.b32.xlu0 %v478, 32
      %v549 = vpop.permute.xlu0 %548
      %vm550 = vcmask 261120
      %v551 = vsel %vm550, %v547, %v549
      %vm552 = vcmp.ne.s16.totalorder %v547, 0
      %vm553 = vcmp.ne.s16.totalorder %v551, 0
      %vm554 = vcmp.ne.s16.totalorder %v549, 0
      %v555 = vsel %vm552, %v425, 0
      %v556 = vsel %vm553, %v418, 0
      %v557 = vsel %vm554, %v431, 0
      %v558 = vsel %vm552, %v428, 0
      %v559 = vsel %vm553, %v419, 0
      %v560 = vsel %vm554, %v434, 0
      %561 = vrot.lane.b32.xlu0 %v496, 34
      %v562 = vpop.permute.xlu0 %561
      %563 = vrot.lane.b32.xlu0 %v500, 34
      %v564 = vpop.permute.xlu0 %563
      %vm565 = vcmask 277504
      %v566 = vsel %vm565, %v562, %v564
      %vm567 = vcmp.ne.s16.totalorder %v562, 0
      %vm568 = vcmp.ne.s16.totalorder %v566, 0
      %vm569 = vcmp.ne.s16.totalorder %v564, 0
      %v570 = vsel %vm567, %v425, 0
      %v571 = vsel %vm568, %v418, 0
      %v572 = vsel %vm569, %v431, 0
      %v573 = vsel %vm567, %v428, 0
      %v574 = vsel %vm568, %v419, 0
      %v575 = vsel %vm569, %v434, 0
      %580 = vrot.lane.b32.xlu0 %v425, 127
      %v581 = vpop.permute.xlu0 %580
      %582 = vrot.lane.b32.xlu0 %v418, 127
      %v583 = vpop.permute.xlu0 %582
      %584 = vrot.lane.b32.xlu0 %v431, 127
      %v585 = vpop.permute.xlu0 %584
      %586 = vrot.lane.b32.xlu0 %v428, 127
      %v587 = vpop.permute.xlu0 %586
      %588 = vrot.lane.b32.xlu0 %v419, 127
      %v589 = vpop.permute.xlu0 %588
      %590 = vrot.lane.b32.xlu0 %v434, 127
      %v591 = vpop.permute.xlu0 %590
      %vm592 = vcmask 1039360
      %v593 = vsel %vm592, %v581, %v583
      %v594 = vsel %vm592, %v583, %v585
      %v595 = vsel %vm592, %v587, %v589
      %v596 = vsel %vm592, %v589, %v591
      %607 = vrot.lane.b32.xlu0 %v510, 126
      %v608 = vpop.permute.xlu0 %607
      %609 = vrot.lane.b32.xlu0 %v511, 126
      %v610 = vpop.permute.xlu0 %609
      %611 = vrot.lane.b32.xlu0 %v512, 126
      %v612 = vpop.permute.xlu0 %611
      %613 = vrot.lane.b32.xlu0 %v513, 126
      %v614 = vpop.permute.xlu0 %613
      %615 = vrot.lane.b32.xlu0 %v514, 126
      %v616 = vpop.permute.xlu0 %615
      %617 = vrot.lane.b32.xlu0 %v515, 126
      %v618 = vpop.permute.xlu0 %617
      %vm619 = vcmask 1031168
      %v620 = vsel %vm619, %v608, %v610
      %v621 = vsel %vm619, %v610, %v612
      %v622 = vsel %vm619, %v614, %v616
      %v623 = vsel %vm619, %v616, %v618
      %634 = vrot.lane.b32.xlu0 %v525, 112
      %v635 = vpop.permute.xlu0 %634
      %636 = vrot.lane.b32.xlu0 %v526, 112
      %v637 = vpop.permute.xlu0 %636
      %638 = vrot.lane.b32.xlu0 %v527, 112
      %v639 = vpop.permute.xlu0 %638
      %640 = vrot.lane.b32.xlu0 %v528, 112
      %v641 = vpop.permute.xlu0 %640
      %642 = vrot.lane.b32.xlu0 %v529, 112
      %v643 = vpop.permute.xlu0 %642
      %644 = vrot.lane.b32.xlu0 %v530, 112
      %v645 = vpop.permute.xlu0 %644
      %vm646 = vcmask 916480
      %v647 = vsel %vm646, %v635, %v637
      %v648 = vsel %vm646, %v637, %v639
      %v649 = vsel %vm646, %v641, %v643
      %v650 = vsel %vm646, %v643, %v645
      %661 = vrot.lane.b32.xlu0 %v540, 110
      %v662 = vpop.permute.xlu0 %661
      %663 = vrot.lane.b32.xlu0 %v541, 110
      %v664 = vpop.permute.xlu0 %663
      %665 = vrot.lane.b32.xlu0 %v542, 110
      %v666 = vpop.permute.xlu0 %665
      %667 = vrot.lane.b32.xlu0 %v543, 110
      %v668 = vpop.permute.xlu0 %667
      %669 = vrot.lane.b32.xlu0 %v544, 110
      %v670 = vpop.permute.xlu0 %669
      %671 = vrot.lane.b32.xlu0 %v545, 110
      %v672 = vpop.permute.xlu0 %671
      %vm673 = vcmask 900096
      %v674 = vsel %vm673, %v662, %v664
      %v675 = vsel %vm673, %v664, %v666
      %v676 = vsel %vm673, %v668, %v670
      %v677 = vsel %vm673, %v670, %v672
      %688 = vrot.lane.b32.xlu0 %v555, 96
      %v689 = vpop.permute.xlu0 %688
      %690 = vrot.lane.b32.xlu0 %v556, 96
      %v691 = vpop.permute.xlu0 %690
      %692 = vrot.lane.b32.xlu0 %v557, 96
      %v693 = vpop.permute.xlu0 %692
      %694 = vrot.lane.b32.xlu0 %v558, 96
      %v695 = vpop.permute.xlu0 %694
      %696 = vrot.lane.b32.xlu0 %v559, 96
      %v697 = vpop.permute.xlu0 %696
      %698 = vrot.lane.b32.xlu0 %v560, 96
      %v699 = vpop.permute.xlu0 %698
      %vm700 = vcmask 785408
      %v701 = vsel %vm700, %v689, %v691
      %v702 = vsel %vm700, %v691, %v693
      %v703 = vsel %vm700, %v695, %v697
      %v704 = vsel %vm700, %v697, %v699
      %709 = vrot.lane.b32.xlu0 %v425, 95
      %v710 = vpop.permute.xlu0 %709
      %711 = vrot.lane.b32.xlu0 %v418, 95
      %v712 = vpop.permute.xlu0 %711
      %713 = vrot.lane.b32.xlu0 %v431, 95
      %v714 = vpop.permute.xlu0 %713
      %715 = vrot.lane.b32.xlu0 %v428, 95
      %v716 = vpop.permute.xlu0 %715
      %717 = vrot.lane.b32.xlu0 %v419, 95
      %v718 = vpop.permute.xlu0 %717
      %719 = vrot.lane.b32.xlu0 %v434, 95
      %v720 = vpop.permute.xlu0 %719
      %vm721 = vcmask 777216
      %v722 = vsel %vm721, %v710, %v712
      %v723 = vsel %vm721, %v712, %v714
      %v724 = vsel %vm721, %v716, %v718
      %v725 = vsel %vm721, %v718, %v720
      %736 = vrot.lane.b32.xlu0 %v570, 94
      %v737 = vpop.permute.xlu0 %736
      %738 = vrot.lane.b32.xlu0 %v571, 94
      %v739 = vpop.permute.xlu0 %738
      %740 = vrot.lane.b32.xlu0 %v572, 94
      %v741 = vpop.permute.xlu0 %740
      %742 = vrot.lane.b32.xlu0 %v573, 94
      %v743 = vpop.permute.xlu0 %742
      %744 = vrot.lane.b32.xlu0 %v574, 94
      %v745 = vpop.permute.xlu0 %744
      %746 = vrot.lane.b32.xlu0 %v575, 94
      %v747 = vpop.permute.xlu0 %746
      %vm748 = vcmask 769024
      %v749 = vsel %vm748, %v737, %v739
      %v750 = vsel %vm748, %v739, %v741
      %v751 = vsel %vm748, %v743, %v745
      %v752 = vsel %vm748, %v745, %v747
      %v757 = vld [vmem:[%s3] sm:$0xff]
      %v758 = vld [vmem:[%s3 + $0x8] sm:$0xf]
      %v759 = vld [vmem:[%s3 + $0xc] sm:$0xff]
      %v760 = vld [vmem:[%s3 + $0x14] sm:$0xf]
      %v761 = vld [vmem:[%s3 + $0x18] sm:$0xff]
      %v762 = vld [vmem:[%s3 + $0x20] sm:$0xf]
      %v763 = vld [vmem:[%s3 + $0x24] sm:$0xff]
      %v764 = vld [vmem:[%s3 + $0x2c] sm:$0xf]
      %v765 = vld [vmem:[%s4] sm:$0xff]
      %v766 = vld [vmem:[%s4 + $0x8] sm:$0xff]
      %v767 = vld [vmem:[%s4 + $0x10] sm:$0xff]
      %v768 = vld [vmem:[%s4 + $0x18] sm:$0xff]
      %v769 = vld [vmem:[%s4 + $0x20] sm:$0xff]
      %v770 = vld [vmem:[%s4 + $0x28] sm:$0xff]
      %v771 = vld [vmem:[%s4 + $0x30] sm:$0xff]
      %v772 = vld [vmem:[%s4 + $0x38] sm:$0xff]
      %v781 = vunpack.c.l.b16 %v757
      %v782 = vunpack.c.h.b16 %v757
      %v783 = vunpack.c.l.b16 %v758
      %v784 = vunpack.c.l.b16 %v759
      %v785 = vunpack.c.h.b16 %v759
      %v786 = vunpack.c.l.b16 %v760
      %v787 = vunpack.c.l.b16 %v761
      %v788 = vunpack.c.h.b16 %v761
      %v789 = vunpack.c.l.b16 %v762
      %v790 = vunpack.c.l.b16 %v763
      %v791 = vunpack.c.h.b16 %v763
      %v792 = vunpack.c.l.b16 %v764
      %v793 = vpack.c.b16 %v784, %v781
      %v794 = vpack.c.b16 %v785, %v782
      %v795 = vpack.c.b16 %v786, %v783
      %v796 = vpack.c.b16 %v790, %v787
      %v797 = vpack.c.b16 %v791, %v788
      %v798 = vpack.c.b16 %v792, %v789
      %vm803 = vcmask 261120
      %v805 = vsel %vm803, %v795, 0
      %v808 = vsel %vm803, %v798, 0
      %810 = vmatprep.subr.bf16.mxu0 %v482
      %811 = vmatpush1.bf16.msra.mxu0 %v481
      %812 = vmatprep.subr.bf16.mxu0 %v484
      %813 = vmatpush1.bf16.msra.mxu0 %v483
      %814 = vmatprep.subr.bf16.mxu0 %v594
      %815 = vmatpush1.bf16.msra.mxu0 %v593
      %816 = vmatprep.subr.bf16.mxu0 %v596
      %817 = vmatpush1.bf16.msra.mxu0 %v595
      %818 = vmatprep.subr.bf16.mxu0 %v621
      %819 = vmatpush1.bf16.msra.mxu0 %v620
      %820 = vmatprep.subr.bf16.mxu0 %v623
      %821 = vmatpush1.bf16.msra.mxu0 %v622
      %822 = vmatprep.subr.bf16.mxu0 %v648
      %823 = vmatpush1.bf16.msra.mxu0 %v647
      %824 = vmatprep.subr.bf16.mxu0 %v650
      %825 = vmatpush1.bf16.msra.mxu0 %v649
      %826 = vmatprep.subr.bf16.mxu0 %v402
      %827 = vmatpush1.bf16.msra.mxu0 %v401
      %828 = vmatprep.subr.bf16.mxu0 %v404
      %829 = vmatpush1.bf16.msra.mxu0 %v403
      %830 = vmatprep.subr.bf16.mxu0 %v675
      %831 = vmatpush1.bf16.msra.mxu0 %v674
      %832 = vmatprep.subr.bf16.mxu0 %v677
      %833 = vmatpush1.bf16.msra.mxu0 %v676
      %834 = vmatprep.subr.bf16.mxu0 %v702
      %835 = vmatpush1.bf16.msra.mxu0 %v701
      %836 = vmatprep.subr.bf16.mxu0 %v704
      %837 = vmatpush1.bf16.msra.mxu0 %v703
      %838 = vmatprep.subr.bf16.mxu0 %v723
      %839 = vmatpush1.bf16.msra.mxu0 %v722
      %840 = vmatprep.subr.bf16.mxu0 %v725
      %841 = vmatpush1.bf16.msra.mxu0 %v724
      %842 = vmatprep.mubr.bf16.mxu0 %v794
      %843 = vmatmul.mubr.bf16.gmra.mrb[0].mxu0 %v793
      %v844 = vpop.f32.mrb[0].mxu0
      %v845 = vadd.f32 %v765, %v844
      %v846 = vpop.f32.mrb[0].mxu0
      %v847 = vadd.f32 %v766, %v846
      %v848 = vpop.f32.mrb[0].mxu0
      %v849 = vadd.f32 %v767, %v848
      %v850 = vpop.f32.mrb[0].mxu0
      %v851 = vadd.f32 %v768, %v850
      %852 = vmatprep.mubr.bf16.mxu0 %v797
      %853 = vmatmul.mubr.bf16.gmra.mrb[0].mxu0 %v796
      %v854 = vpop.f32.mrb[0].mxu0
      %v855 = vadd.f32 %v769, %v854
      %v856 = vpop.f32.mrb[0].mxu0
      %v857 = vadd.f32 %v770, %v856
      %v858 = vpop.f32.mrb[0].mxu0
      %v859 = vadd.f32 %v771, %v858
      %v860 = vpop.f32.mrb[0].mxu0
      %v861 = vadd.f32 %v772, %v860
      %862 = vdwg.mxu0
      %863 = vmatprep.subr.bf16.mxu0 %v750
      %864 = vmatpush1.bf16.msra.mxu0 %v749
      %865 = vmatprep.subr.bf16.mxu0 %v752
      %866 = vmatpush1.bf16.msra.mxu0 %v751
      %867 = vmatprep.subr.bf16.mxu0 0
      %868 = vmatpush1.bf16.msra.mxu0 0
      %869 = vmatprep.subr.bf16.mxu0 0
      %870 = vmatpush1.bf16.msra.mxu0 0
      %871 = vmatprep.subr.bf16.mxu0 0
      %872 = vmatpush1.bf16.msra.mxu0 0
      %873 = vmatprep.subr.bf16.mxu0 0
      %874 = vmatpush1.bf16.msra.mxu0 0
      %875 = vmatprep.subr.bf16.mxu0 0
      %876 = vmatpush1.bf16.msra.mxu0 0
      %877 = vmatprep.subr.bf16.mxu0 0
      %878 = vmatpush1.bf16.msra.mxu0 0
      %879 = vmatprep.subr.bf16.mxu0 0
      %880 = vmatpush1.bf16.msra.mxu0 0
      %881 = vmatprep.subr.bf16.mxu0 0
      %882 = vmatpush1.bf16.msra.mxu0 0
      %883 = vmatprep.subr.bf16.mxu0 0
      %884 = vmatpush1.bf16.msra.mxu0 0
      %885 = vmatprep.subr.bf16.mxu0 0
      %886 = vmatpush1.bf16.msra.mxu0 0
      %887 = vmatprep.subr.bf16.mxu0 0
      %888 = vmatpush1.bf16.msra.mxu0 0
      %889 = vmatprep.subr.bf16.mxu0 0
      %890 = vmatpush1.bf16.msra.mxu0 0
      %891 = vmatprep.subr.bf16.mxu0 0
      %892 = vmatpush1.bf16.msra.mxu0 0
      %893 = vmatprep.subr.bf16.mxu0 0
      %894 = vmatpush1.bf16.msra.mxu0 0
      %895 = vmatprep.mubr.bf16.mxu0 0
      %896 = vmatmul.mubr.bf16.gmra.mrb[0].mxu0 %v805
      %v897 = vpop.f32.mrb[0].mxu0
      %v898 = vadd.f32 %v845, %v897
      %v899 = vpop.f32.mrb[0].mxu0
      %v900 = vadd.f32 %v847, %v899
      %v901 = vpop.f32.mrb[0].mxu0
      %v902 = vadd.f32 %v849, %v901
      %v903 = vpop.f32.mrb[0].mxu0
      %v904 = vadd.f32 %v851, %v903
      %905 = vmatprep.mubr.bf16.mxu0 0
      %906 = vmatmul.mubr.bf16.gmra.mrb[0].mxu0 %v808
      %v907 = vpop.f32.mrb[0].mxu0
      %v908 = vadd.f32 %v855, %v907
      %v909 = vpop.f32.mrb[0].mxu0
      %v910 = vadd.f32 %v857, %v909
      %v911 = vpop.f32.mrb[0].mxu0
      %v912 = vadd.f32 %v859, %v911
      %v913 = vpop.f32.mrb[0].mxu0
      %v914 = vadd.f32 %v861, %v913
      %915 = vdwg.mxu0
      %v916 = vmax.f32 %v898, 0.0
      %v917 = vmax.f32 %v900, 0.0
      %v918 = vmax.f32 %v902, 0.0
      %v919 = vmax.f32 %v904, 0.0
      %v920 = vmax.f32 %v908, 0.0
      %v921 = vmax.f32 %v910, 0.0
      %v922 = vmax.f32 %v912, 0.0
      %v923 = vmax.f32 %v914, 0.0
      %v924 = vld [vmem:[%s5] sm:$0x3]
      %v925 = vpack.c.bf16 %v918, %v916
      %v926 = vpack.c.bf16 %v919, %v917
      %v927 = vpack.c.bf16 %v922, %v920
      %v928 = vpack.c.bf16 %v923, %v921
      %v929 = vld [vmem:[%s6] sm:$0xf]
      %931 = vset.pattern.permute.xlu0 0
      %932 = vperm.xlu0 %931, %v929
      %v933 = vpop.permute.xlu0 %932
      %v936 = vsel %vm803, %v924, 0
      %938 = vmatprep.subr.bf16.mxu0 %v926
      %939 = vmatpush1.bf16.msra.mxu0 %v925
      %940 = vmatprep.subr.bf16.mxu0 %v928
      %941 = vmatpush1.bf16.msra.mxu0 %v927
      %942 = vmatprep.subr.bf16.mxu0 0
      %943 = vmatpush1.bf16.msra.mxu0 0
      %944 = vmatprep.subr.bf16.mxu0 0
      %945 = vmatpush1.bf16.msra.mxu0 0
      %946 = vmatprep.subr.bf16.mxu0 0
      %947 = vmatpush1.bf16.msra.mxu0 0
      %948 = vmatprep.subr.bf16.mxu0 0
      %949 = vmatpush1.bf16.msra.mxu0 0
      %950 = vmatprep.subr.bf16.mxu0 0
      %951 = vmatpush1.bf16.msra.mxu0 0
      %952 = vmatprep.subr.bf16.mxu0 0
      %953 = vmatpush1.bf16.msra.mxu0 0
      %954 = vmatprep.subr.bf16.mxu0 0
      %955 = vmatpush1.bf16.msra.mxu0 0
      %956 = vmatprep.subr.bf16.mxu0 0
      %957 = vmatpush1.bf16.msra.mxu0 0
      %958 = vmatprep.subr.bf16.mxu0 0
      %959 = vmatpush1.bf16.msra.mxu0 0
      %960 = vmatprep.subr.bf16.mxu0 0
      %961 = vmatpush1.bf16.msra.mxu0 0
      %962 = vmatprep.subr.bf16.mxu0 0
      %963 = vmatpush1.bf16.msra.mxu0 0
      %964 = vmatprep.subr.bf16.mxu0 0
      %965 = vmatpush1.bf16.msra.mxu0 0
      %966 = vmatprep.subr.bf16.mxu0 0
      %967 = vmatpush1.bf16.msra.mxu0 0
      %968 = vmatprep.subr.bf16.mxu0 0
      %969 = vmatpush1.bf16.msra.mxu0 0
      %970 = vmatprep.mubr.bf16.mxu0 0
      %971 = vmatmul.mubr.bf16.gmra.mrb[0].mxu0 %v936
      %v972 = vpop.f32.mrb[0].mxu0
      %v973 = vadd.f32 %v933, %v972
      %v974 = vpop.f32.mrb[0].mxu0
      %v975 = vadd.f32 %v933, %v974
      %v976 = vpop.f32.mrb[0].mxu0
      %v977 = vpop.f32.mrb[0].mxu0
      %978 = vdwg.mxu0
      %v979 = vmul.f32 %v282, 0.5
      %v981 = vcombine.high %v979, %v979
      %v983 = vadd.f32 %v973, %v979
      %v984 = vadd.f32 %v975, %v981
      %v987 = vcombine.low %v983, %v984
      %989 = vst [vmem:[%s278] sm:$0xff] %v987
      %p990 = scmp.lt.s32.totalorder %s18, 1
      %s991 = scalar_select %p990, %s18, 1
      %s992 = smul.addr %s991, 2
      %s993 = smul.addr %s992, 4
      %s994 = scalar_lea.vmem %s7, %s993
      // Predicated region
      $region49: #{df_forward.1} parent=47 // pred_check
        %p995 = pneg %p188
      $region50: #{df_forward.1} parent=47 // pred_check_branch
        %997 = sbr.rel (%p995) target = $region52
      $region51: #{df_forward.1} parent=47 // pred_region
        _
      $region52: #{df_forward.1} parent=47 // pred_fallthru
        _
    $region48: #{df_forward.1} parent=5 // pred_fallthru
      _
    %p998 = scmp.le.s32.totalorder 2, %s13
    // Predicated region
    $region53: #{df_forward.1} parent=5 // pred_check
      %p999 = pneg %p998
    $region54: #{df_forward.1} parent=5 // pred_check_branch
      %1001 = sbr.rel (%p999) target = $region56
    $region55: #{df_forward.1} parent=5 // pred_region
      %s1002 = ssub.s32 %s13, 2
      // Predicated region
      $region57: #{df_forward.1} parent=55 // pred_check
        %p1003 = pneg %p194
      $region58: #{df_forward.1} parent=55 // pred_check_branch
        %1005 = sbr.rel (%p1003) target = $region60
      $region59: #{df_forward.1} parent=55 // pred_region
        %p1006 = scmp.lt.s32.totalorder %s19, 1
        %s1007 = scalar_select %p1006, %s19, 1
        %s1008 = smul.addr %s1007, 2
        %s1009 = smul.addr %s1008, 4
        %s1010 = scalar_lea.vmem %s7, %s1009
      $region60: #{df_forward.1} parent=55 // pred_fallthru
        _
    $region56: #{df_forward.1} parent=5 // pred_fallthru
      _
  $region6: #{df_forward.1} parent=0 // loop_footer
    %s17 = sadd.s32 1, %s13
  $region7: #{df_forward.1} parent=0 // loop_footer_branch
    %12 = sbr.rel target = $region3
  $region8: #{df_forward.1} parent=0 // loop_exit
    _

</llo_original>
